<compile_context>
chip_gen: v5e
topology: v5e:2x2
jax: 0.10.0
libtpu: 0.0.40
codegen_flags: <defaults>
</compile_context>

<pallas_src>
import jax
import jax.numpy as jnp
from jax.experimental import pallas as pl
from jax.experimental.pallas import tpu as pltpu

IN_DIM = 784        # 28 * 28
IN_PAD = 896        # 7 * 128 -> lane-aligned feature dimension
HID_DIM = 32


def _round_up(n, m):
    return ((n + m - 1) // m) * m


def _stdae_kernel(x_ref, w4t_ref, b4_ref, w5t_ref, b5_ref, o_ref):
    """relu(x @ W4^T + b4) -> sigmoid(h @ W5^T + b5), fused in VMEM."""
    x = x_ref[...]                                               # (tb, 896)
    # Encoder: Linear(784->32) + ReLU (f32 accumulation on the MXU)
    h = jnp.dot(x, w4t_ref[...], preferred_element_type=jnp.float32)
    h = jnp.maximum(h + b4_ref[...], 0.0)                        # bias broadcasts (1,32)
    # Decoder: Linear(32->784) + Sigmoid
    y = jnp.dot(h.astype(w5t_ref.dtype), w5t_ref[...],
                preferred_element_type=jnp.float32)
    y = y + b5_ref[...]                                          # bias broadcasts (1,896)
    o_ref[...] = jax.nn.sigmoid(y).astype(o_ref.dtype)


def stdae_forward(x, w4, b4, w5, b5, *, tile_b=512, io_dtype=jnp.float32):
    """x: (B, 28, 28). Weights in PyTorch convention:
       w4: (32, 784), b4: (32,), w5: (784, 32), b5: (784,)."""
    B = x.shape[0]
    x2d = x.reshape(B, IN_DIM)                                   # torch.reshape(x, (-1, 784))

    # Effective batch tile: large for throughput, shrunk (multiple of 8) for
    # small batches; pad the batch up to a whole number of tiles.
    tile_b_eff = min(tile_b, _round_up(B, 8))
    B_pad = _round_up(B, tile_b_eff)

    # Zero-pad batch and the 784 -> 896 feature dim (lane-dense tiles).
    x2d_p = jnp.zeros((B_pad, IN_PAD), io_dtype).at[:B, :IN_DIM].set(
        x2d.astype(io_dtype))
    w4t_p = jnp.zeros((IN_PAD, HID_DIM), io_dtype).at[:IN_DIM, :].set(
        w4.T.astype(io_dtype))                                   # (896, 32)
    w5t_p = jnp.zeros((HID_DIM, IN_PAD), io_dtype).at[:, :IN_DIM].set(
        w5.T.astype(io_dtype))                                   # (32, 896)
    b4r = b4.reshape(1, HID_DIM).astype(jnp.float32)
    b5r = jnp.zeros((1, IN_PAD), jnp.float32).at[:, :IN_DIM].set(
        b5.reshape(1, IN_DIM).astype(jnp.float32))

    grid = (B_pad // tile_b_eff,)
    itemsize = jnp.dtype(io_dtype).itemsize

    weight_bytes = (w4t_p.size + w5t_p.size) * itemsize + (b4r.size + b5r.size) * 4
    io_bytes = 2 * B_pad * IN_PAD * itemsize
    cost = pl.CostEstimate(
        flops=4 * B_pad * IN_PAD * HID_DIM,        # two matmuls
        transcendentals=B_pad * IN_PAD,            # sigmoid
        bytes_accessed=io_bytes + weight_bytes,
    )

    # VMEM: double-buffered x + out tiles + resident weights + headroom.
    # Cap at 48 MiB so the same code is safe on v7x (64 MiB physical) and
    # comfortably within v5e/v6e (128 MiB).
    vmem_needed = 4 * tile_b_eff * IN_PAD * itemsize + 2 * weight_bytes + (4 << 20)
    vmem_limit = int(min(max(vmem_needed, 16 << 20), 48 << 20))

    out2d = pl.pallas_call(
        _stdae_kernel,
        out_shape=jax.ShapeDtypeStruct((B_pad, IN_PAD), io_dtype),
        grid_spec=pltpu.PrefetchScalarGridSpec(
            num_scalar_prefetch=0,
            grid=grid,
            in_specs=[
                pl.BlockSpec((tile_b_eff, IN_PAD), lambda i: (i, 0)),   # x tile
                pl.BlockSpec((IN_PAD, HID_DIM), lambda i: (0, 0)),      # W4^T (resident)
                pl.BlockSpec((1, HID_DIM), lambda i: (0, 0)),           # b4
                pl.BlockSpec((HID_DIM, IN_PAD), lambda i: (0, 0)),      # W5^T (resident)
                pl.BlockSpec((1, IN_PAD), lambda i: (0, 0)),            # b5
            ],
            out_specs=pl.BlockSpec((tile_b_eff, IN_PAD), lambda i: (i, 0)),
        ),
        compiler_params=pltpu.CompilerParams(
            dimension_semantics=("parallel",),      # megacore-shard batch tiles (v7x)
            vmem_limit_bytes=vmem_limit),
        cost_estimate=cost,
    )(x2d_p, w4t_p, b4r, w5t_p, b5r)

    # Drop batch/feature padding, reshape back like torch.reshape(x, (-1, 28, 28)).
    return out2d[:B, :IN_DIM].astype(jnp.float32).reshape(B, 28, 28)


def _init_params(key):
    """Deterministic init matching nn.Linear shapes (PyTorch-style uniform bounds)."""
    k1, k2, k3, k4 = jax.random.split(key, 4)
    bound4 = 1.0 / jnp.sqrt(IN_DIM)
    bound5 = 1.0 / jnp.sqrt(HID_DIM)
    w4 = jax.random.uniform(k1, (HID_DIM, IN_DIM), jnp.float32, -bound4, bound4)
    b4 = jax.random.uniform(k2, (HID_DIM,), jnp.float32, -bound4, bound4)
    w5 = jax.random.uniform(k3, (IN_DIM, HID_DIM), jnp.float32, -bound5, bound5)
    b5 = jax.random.uniform(k4, (IN_DIM,), jnp.float32, -bound5, bound5)
    return w4, b4, w5, b5


if __name__ == "__main__":
    key = jax.random.PRNGKey(0)
    k_x, k_p = jax.random.split(key)

    B = 8
    x = jax.random.normal(k_x, (B, 28, 28), jnp.float32)        # MNIST-like input
    w4, b4, w5, b5 = _init_params(k_p)

    out = stdae_forward(x, w4, b4, w5, b5)
    jax.block_until_ready(out)

    # Reference in plain JAX (f32).
    ref = jax.nn.sigmoid(
        jnp.maximum(x.reshape(B, IN_DIM) @ w4.T + b4, 0.0) @ w5.T + b5
    ).reshape(B, 28, 28)
    assert out.shape == (B, 28, 28)
    assert jnp.allclose(out, ref, atol=1e-5, rtol=1e-5)

    # Also exercise a batch that is not a multiple of the tile (padding path).
    B2 = 37
    x2 = jax.random.normal(k_x, (B2, 28, 28), jnp.float32)
    out2 = stdae_forward(x2, w4, b4, w5, b5)
    jax.block_until_ready(out2)
    ref2 = jax.nn.sigmoid(
        jnp.maximum(x2.reshape(B2, IN_DIM) @ w4.T + b4, 0.0) @ w5.T + b5
    ).reshape(B2, 28, 28)
    assert out2.shape == (B2, 28, 28)
    assert jnp.allclose(out2, ref2, atol=1e-5, rtol=1e-5)

    print("KERNEL_OK")
</pallas_src>

<mosaic_0001>
module attributes {stable_mosaic.version = 11 : i64} {
  func.func @_stdae_kernel(%arg0: i32, %arg1: memref<8x896xf32, #tpu.memory_space<vmem>>, %arg2: memref<896x32xf32, #tpu.memory_space<vmem>>, %arg3: memref<1x32xf32, #tpu.memory_space<vmem>>, %arg4: memref<32x896xf32, #tpu.memory_space<vmem>>, %arg5: memref<1x896xf32, #tpu.memory_space<vmem>>, %arg6: memref<8x896xf32, #tpu.memory_space<vmem>>) attributes {dimension_semantics = [#tpu.dimension_semantics<parallel>], iteration_bounds = array<i64: 1>, scalar_prefetch = 0 : i64, scratch_operands = 0 : i64, tpu.core_type = #tpu.core_type<tc>, window_params = [{transform_indices = @transform_0, window_bounds = array<i64: 8, 896>}, {pipeline_mode = #tpu.pipeline_mode<synchronous>, transform_indices = @transform_1, window_bounds = array<i64: 896, 32>}, {pipeline_mode = #tpu.pipeline_mode<synchronous>, transform_indices = @transform_2, window_bounds = array<i64: 1, 32>}, {pipeline_mode = #tpu.pipeline_mode<synchronous>, transform_indices = @transform_3, window_bounds = array<i64: 32, 896>}, {pipeline_mode = #tpu.pipeline_mode<synchronous>, transform_indices = @transform_4, window_bounds = array<i64: 1, 896>}, {transform_indices = @transform_5, window_bounds = array<i64: 8, 896>}]} {
    %c0 = arith.constant 0 : index
    %c0_0 = arith.constant 0 : index
    %0 = vector.load %arg1[%c0, %c0_0] : memref<8x896xf32, #tpu.memory_space<vmem>>, vector<8x896xf32>
    %c0_1 = arith.constant 0 : index
    %c0_2 = arith.constant 0 : index
    %1 = vector.load %arg2[%c0_1, %c0_2] : memref<896x32xf32, #tpu.memory_space<vmem>>, vector<896x32xf32>
    %cst = arith.constant dense<0.000000e+00> : vector<8x32xf32>
    %2 = tpu.matmul %0, %1, %cst {dimension_numbers = #tpu.dot_dimension_numbers<[1], [0], [0], [1], [0, 0, 1, 1], [], []>} : vector<8x896xf32>, vector<896x32xf32>, vector<8x32xf32> -> vector<8x32xf32>
    %c0_3 = arith.constant 0 : index
    %c0_4 = arith.constant 0 : index
    %3 = vector.load %arg3[%c0_3, %c0_4] : memref<1x32xf32, #tpu.memory_space<vmem>>, vector<1x32xf32>
    %4 = vector.broadcast %3 : vector<1x32xf32> to vector<8x32xf32>
    %5 = arith.addf %2, %4 : vector<8x32xf32>
    %cst_5 = arith.constant 0.000000e+00 : f32
    %6 = vector.broadcast %cst_5 : f32 to vector<8x32xf32>
    %7 = arith.maximumf %5, %6 : vector<8x32xf32>
    %c0_6 = arith.constant 0 : index
    %c0_7 = arith.constant 0 : index
    %8 = vector.load %arg4[%c0_6, %c0_7] : memref<32x896xf32, #tpu.memory_space<vmem>>, vector<32x896xf32>
    %cst_8 = arith.constant dense<0.000000e+00> : vector<8x896xf32>
    %9 = tpu.matmul %7, %8, %cst_8 {dimension_numbers = #tpu.dot_dimension_numbers<[1], [0], [0], [1], [0, 0, 1, 1], [], []>} : vector<8x32xf32>, vector<32x896xf32>, vector<8x896xf32> -> vector<8x896xf32>
    %c0_9 = arith.constant 0 : index
    %c0_10 = arith.constant 0 : index
    %10 = vector.load %arg5[%c0_9, %c0_10] : memref<1x896xf32, #tpu.memory_space<vmem>>, vector<1x896xf32>
    %11 = vector.broadcast %10 : vector<1x896xf32> to vector<8x896xf32>
    %12 = arith.addf %9, %11 : vector<8x896xf32>
    %13 = arith.negf %12 : vector<8x896xf32>
    %14 = math.exp %13 : vector<8x896xf32>
    %cst_11 = arith.constant 1.000000e+00 : f32
    %15 = vector.broadcast %cst_11 : f32 to vector<8x896xf32>
    %16 = arith.addf %15, %14 : vector<8x896xf32>
    %17 = arith.divf %15, %16 : vector<8x896xf32>
    %c0_12 = arith.constant 0 : index
    %c0_13 = arith.constant 0 : index
    %18 = vector.load %arg6[%c0_12, %c0_13] : memref<8x896xf32, #tpu.memory_space<vmem>>, vector<8x896xf32>
    tpu.vector_store %arg6[%c0_12, %c0_13], %17 {strides = array<i32>} : memref<8x896xf32, #tpu.memory_space<vmem>>, vector<8x896xf32>,
    return
  }
  func.func @transform_0(%arg0: i32) -> (i32, i32) {
    %c0_i32 = arith.constant 0 : i32
    %c0_i32_0 = arith.constant 0 : i32
    return %arg0, %c0_i32 : i32, i32
  }
  func.func @transform_1(%arg0: i32) -> (i32, i32) {
    %c0_i32 = arith.constant 0 : i32
    %c0_i32_0 = arith.constant 0 : i32
    %c0_i32_1 = arith.constant 0 : i32
    return %c0_i32, %c0_i32_0 : i32, i32
  }
  func.func @transform_2(%arg0: i32) -> (i32, i32) {
    %c0_i32 = arith.constant 0 : i32
    %c0_i32_0 = arith.constant 0 : i32
    %c0_i32_1 = arith.constant 0 : i32
    return %c0_i32, %c0_i32_0 : i32, i32
  }
  func.func @transform_3(%arg0: i32) -> (i32, i32) {
    %c0_i32 = arith.constant 0 : i32
    %c0_i32_0 = arith.constant 0 : i32
    %c0_i32_1 = arith.constant 0 : i32
    return %c0_i32, %c0_i32_0 : i32, i32
  }
  func.func @transform_4(%arg0: i32) -> (i32, i32) {
    %c0_i32 = arith.constant 0 : i32
    %c0_i32_0 = arith.constant 0 : i32
    %c0_i32_1 = arith.constant 0 : i32
    return %c0_i32, %c0_i32_0 : i32, i32
  }
  func.func @transform_5(%arg0: i32) -> (i32, i32) {
    %c0_i32 = arith.constant 0 : i32
    %c0_i32_0 = arith.constant 0 : i32
    return %arg0, %c0_i32 : i32, i32
  }
}

</mosaic_0001>

<llo_original>
// kernel: tpu_custom_call.1
$region0: #{tpu_custom_call.1}
  #allocation0 [shape = 'u32[]', space=smem, size = 0x4, offset = 0x4, fixed_abs, tag = 'smem constant byte address 0x4 - core index']
  #allocation1 [shape = 'u32[72,128]{1,0:T(1,128)}', space=vmem, size = 0x9000, scoped, tag = 'internal scratch']
  %s0 = inlined_call_operand.vmem [shape: f32[8,896], index: 0, kind: input, shape index: {}]
  %s1 = inlined_call_operand.vmem [shape: f32[896,32], index: 1, kind: input, shape index: {}]
  %s2 = inlined_call_operand.vmem [shape: f32[1,32], index: 2, kind: input, shape index: {}]
  %s3 = inlined_call_operand.vmem [shape: f32[32,896], index: 3, kind: input, shape index: {}]
  %s4 = inlined_call_operand.vmem [shape: f32[1,896], index: 4, kind: input, shape index: {}]
  %s5 = inlined_call_operand.hbm [shape: f32[8,896], index: 5, kind: output, shape index: {}]
  %s6 = sld [smem:[#allocation0]]
  $region30: #{tpu_custom_call.1} parent=0
    _
  %s8 = ssub.s32 1, %s6
  %s9 = scalar_select 0, %s8, %s6
  $region1: #{tpu_custom_call.1} parent=0
    #allocation2 [shape = 'u8[28672]{0}', space=vmem, size = 0x7000, scoped, tag = 'output window, operand 0, single buffered']
    #allocation3 [shape = 's32[1]{0}', space=sflag, size = 0x4, scoped, tag = 'scoped memory for tpu_custom_call.1']
    %10 = vsyncpa [#allocation3], 0
    // Predicated region
    $region2: #{tpu_custom_call.1} parent=1 // pred_check
      _
    $region3: #{tpu_custom_call.1} parent=1 // pred_check_branch
      %12 = sbr.rel (0) target = $region5
    $region4: #{tpu_custom_call.1} parent=1 // pred_region
      _
    $region5: #{tpu_custom_call.1} parent=1 // pred_fallthru
      _
    // Predicated region
    $region6: #{tpu_custom_call.1} parent=1 // pred_check
      _
    $region7: #{tpu_custom_call.1} parent=1 // pred_check_branch
      %14 = sbr.rel (0) target = $region9
    $region8: #{tpu_custom_call.1} parent=1 // pred_region
      _
    $region9: #{tpu_custom_call.1} parent=1 // pred_fallthru
      _
    // Predicated region
    $region10: #{tpu_custom_call.1} parent=1 // pred_check
      _
    $region11: #{tpu_custom_call.1} parent=1 // pred_check_branch
      %16 = sbr.rel (0) target = $region13
    $region12: #{tpu_custom_call.1} parent=1 // pred_region
      _
    $region13: #{tpu_custom_call.1} parent=1 // pred_fallthru
      _
    // Predicated region
    $region14: #{tpu_custom_call.1} parent=1 // pred_check
      _
    $region15: #{tpu_custom_call.1} parent=1 // pred_check_branch
      %18 = sbr.rel (0) target = $region17
    $region16: #{tpu_custom_call.1} parent=1 // pred_region
      _
    $region17: #{tpu_custom_call.1} parent=1 // pred_fallthru
      _
    // Predicated region
    $region18: #{tpu_custom_call.1} parent=1 // pred_check
      _
    $region19: #{tpu_custom_call.1} parent=1 // pred_check_branch
      %20 = sbr.rel (0) target = $region21
    $region20: #{tpu_custom_call.1} parent=1 // pred_region
      _
    $region21: #{tpu_custom_call.1} parent=1 // pred_fallthru
      _
    %v21 = vld [vmem:[%s0] sm:$0xff]
    %v22 = vld [vmem:[%s0 + $0x8] sm:$0xff]
    %v23 = vld [vmem:[%s0 + $0x10] sm:$0xff]
    %v24 = vld [vmem:[%s0 + $0x18] sm:$0xff]
    %v25 = vld [vmem:[%s0 + $0x20] sm:$0xff]
    %v26 = vld [vmem:[%s0 + $0x28] sm:$0xff]
    %v27 = vld [vmem:[%s0 + $0x30] sm:$0xff]
    %v28 = vld [vmem:[%s1] sm:$0xff]
    %v29 = vld [vmem:[%s1 + $0x8] sm:$0xff]
    %v30 = vld [vmem:[%s1 + $0x10] sm:$0xff]
    %v31 = vld [vmem:[%s1 + $0x18] sm:$0xff]
    %v32 = vld [vmem:[%s1 + $0x20] sm:$0xff]
    %v33 = vld [vmem:[%s1 + $0x28] sm:$0xff]
    %v34 = vld [vmem:[%s1 + $0x30] sm:$0xff]
    %v35 = vld [vmem:[%s1 + $0x38] sm:$0xff]
    %v36 = vld [vmem:[%s1 + $0x40] sm:$0xff]
    %v37 = vld [vmem:[%s1 + $0x48] sm:$0xff]
    %v38 = vld [vmem:[%s1 + $0x50] sm:$0xff]
    %v39 = vld [vmem:[%s1 + $0x58] sm:$0xff]
    %v40 = vld [vmem:[%s1 + $0x60] sm:$0xff]
    %v41 = vld [vmem:[%s1 + $0x68] sm:$0xff]
    %v42 = vld [vmem:[%s1 + $0x70] sm:$0xff]
    %v43 = vld [vmem:[%s1 + $0x78] sm:$0xff]
    %v44 = vld [vmem:[%s1 + $0x80] sm:$0xff]
    %v45 = vld [vmem:[%s1 + $0x88] sm:$0xff]
    %v46 = vld [vmem:[%s1 + $0x90] sm:$0xff]
    %v47 = vld [vmem:[%s1 + $0x98] sm:$0xff]
    %v48 = vld [vmem:[%s1 + $0xa0] sm:$0xff]
    %v49 = vld [vmem:[%s1 + $0xa8] sm:$0xff]
    %v50 = vld [vmem:[%s1 + $0xb0] sm:$0xff]
    %v51 = vld [vmem:[%s1 + $0xb8] sm:$0xff]
    %v52 = vld [vmem:[%s1 + $0xc0] sm:$0xff]
    %v53 = vld [vmem:[%s1 + $0xc8] sm:$0xff]
    %v54 = vld [vmem:[%s1 + $0xd0] sm:$0xff]
    %v55 = vld [vmem:[%s1 + $0xd8] sm:$0xff]
    %v56 = vld [vmem:[%s1 + $0xe0] sm:$0xff]
    %v57 = vld [vmem:[%s1 + $0xe8] sm:$0xff]
    %v58 = vld [vmem:[%s1 + $0xf0] sm:$0xff]
    %v59 = vld [vmem:[%s1 + $0xf8] sm:$0xff]
    %v60 = vld [vmem:[%s1 + $0x100] sm:$0xff]
    %v61 = vld [vmem:[%s1 + $0x108] sm:$0xff]
    %v62 = vld [vmem:[%s1 + $0x110] sm:$0xff]
    %v63 = vld [vmem:[%s1 + $0x118] sm:$0xff]
    %v64 = vld [vmem:[%s1 + $0x120] sm:$0xff]
    %v65 = vld [vmem:[%s1 + $0x128] sm:$0xff]
    %v66 = vld [vmem:[%s1 + $0x130] sm:$0xff]
    %v67 = vld [vmem:[%s1 + $0x138] sm:$0xff]
    %v68 = vld [vmem:[%s1 + $0x140] sm:$0xff]
    %v69 = vld [vmem:[%s1 + $0x148] sm:$0xff]
    %v70 = vld [vmem:[%s1 + $0x150] sm:$0xff]
    %v71 = vld [vmem:[%s1 + $0x158] sm:$0xff]
    %v72 = vld [vmem:[%s1 + $0x160] sm:$0xff]
    %v73 = vld [vmem:[%s1 + $0x168] sm:$0xff]
    %v74 = vld [vmem:[%s1 + $0x170] sm:$0xff]
    %v75 = vld [vmem:[%s1 + $0x178] sm:$0xff]
    %v76 = vld [vmem:[%s1 + $0x180] sm:$0xff]
    %v77 = vld [vmem:[%s1 + $0x188] sm:$0xff]
    %v78 = vld [vmem:[%s1 + $0x190] sm:$0xff]
    %v79 = vld [vmem:[%s1 + $0x198] sm:$0xff]
    %v80 = vld [vmem:[%s1 + $0x1a0] sm:$0xff]
    %v81 = vld [vmem:[%s1 + $0x1a8] sm:$0xff]
    %v82 = vld [vmem:[%s1 + $0x1b0] sm:$0xff]
    %v83 = vld [vmem:[%s1 + $0x1b8] sm:$0xff]
    %v84 = vld [vmem:[%s1 + $0x1c0] sm:$0xff]
    %v85 = vld [vmem:[%s1 + $0x1c8] sm:$0xff]
    %v86 = vld [vmem:[%s1 + $0x1d0] sm:$0xff]
    %v87 = vld [vmem:[%s1 + $0x1d8] sm:$0xff]
    %v88 = vld [vmem:[%s1 + $0x1e0] sm:$0xff]
    %v89 = vld [vmem:[%s1 + $0x1e8] sm:$0xff]
    %v90 = vld [vmem:[%s1 + $0x1f0] sm:$0xff]
    %v91 = vld [vmem:[%s1 + $0x1f8] sm:$0xff]
    %v92 = vld [vmem:[%s1 + $0x200] sm:$0xff]
    %v93 = vld [vmem:[%s1 + $0x208] sm:$0xff]
    %v94 = vld [vmem:[%s1 + $0x210] sm:$0xff]
    %v95 = vld [vmem:[%s1 + $0x218] sm:$0xff]
    %v96 = vld [vmem:[%s1 + $0x220] sm:$0xff]
    %v97 = vld [vmem:[%s1 + $0x228] sm:$0xff]
    %v98 = vld [vmem:[%s1 + $0x230] sm:$0xff]
    %v99 = vld [vmem:[%s1 + $0x238] sm:$0xff]
    %v100 = vld [vmem:[%s1 + $0x240] sm:$0xff]
    %v101 = vld [vmem:[%s1 + $0x248] sm:$0xff]
    %v102 = vld [vmem:[%s1 + $0x250] sm:$0xff]
    %v103 = vld [vmem:[%s1 + $0x258] sm:$0xff]
    %v104 = vld [vmem:[%s1 + $0x260] sm:$0xff]
    %v105 = vld [vmem:[%s1 + $0x268] sm:$0xff]
    %v106 = vld [vmem:[%s1 + $0x270] sm:$0xff]
    %v107 = vld [vmem:[%s1 + $0x278] sm:$0xff]
    %v108 = vld [vmem:[%s1 + $0x280] sm:$0xff]
    %v109 = vld [vmem:[%s1 + $0x288] sm:$0xff]
    %v110 = vld [vmem:[%s1 + $0x290] sm:$0xff]
    %v111 = vld [vmem:[%s1 + $0x298] sm:$0xff]
    %v112 = vld [vmem:[%s1 + $0x2a0] sm:$0xff]
    %v113 = vld [vmem:[%s1 + $0x2a8] sm:$0xff]
    %v114 = vld [vmem:[%s1 + $0x2b0] sm:$0xff]
    %v115 = vld [vmem:[%s1 + $0x2b8] sm:$0xff]
    %v116 = vld [vmem:[%s1 + $0x2c0] sm:$0xff]
    %v117 = vld [vmem:[%s1 + $0x2c8] sm:$0xff]
    %v118 = vld [vmem:[%s1 + $0x2d0] sm:$0xff]
    %v119 = vld [vmem:[%s1 + $0x2d8] sm:$0xff]
    %v120 = vld [vmem:[%s1 + $0x2e0] sm:$0xff]
    %v121 = vld [vmem:[%s1 + $0x2e8] sm:$0xff]
    %v122 = vld [vmem:[%s1 + $0x2f0] sm:$0xff]
    %v123 = vld [vmem:[%s1 + $0x2f8] sm:$0xff]
    %v124 = vld [vmem:[%s1 + $0x300] sm:$0xff]
    %v125 = vld [vmem:[%s1 + $0x308] sm:$0xff]
    %v126 = vld [vmem:[%s1 + $0x310] sm:$0xff]
    %v127 = vld [vmem:[%s1 + $0x318] sm:$0xff]
    %v128 = vld [vmem:[%s1 + $0x320] sm:$0xff]
    %v129 = vld [vmem:[%s1 + $0x328] sm:$0xff]
    %v130 = vld [vmem:[%s1 + $0x330] sm:$0xff]
    %v131 = vld [vmem:[%s1 + $0x338] sm:$0xff]
    %v132 = vld [vmem:[%s1 + $0x340] sm:$0xff]
    %v133 = vld [vmem:[%s1 + $0x348] sm:$0xff]
    %v134 = vld [vmem:[%s1 + $0x350] sm:$0xff]
    %v135 = vld [vmem:[%s1 + $0x358] sm:$0xff]
    %v136 = vld [vmem:[%s1 + $0x360] sm:$0xff]
    %v137 = vld [vmem:[%s1 + $0x368] sm:$0xff]
    %v138 = vld [vmem:[%s1 + $0x370] sm:$0xff]
    %v139 = vld [vmem:[%s1 + $0x378] sm:$0xff]
    %v140 = vld [vmem:[%s2] sm:$0x1]
    %v142 = vperm.slane %v140, 0
    %144 = vmatpush.msra.mxu0 %v43
    %145 = vmatpush.msra.mxu0 %v42
    %146 = vmatpush.msra.mxu0 %v41
    %147 = vmatpush.msra.mxu0 %v40
    %148 = vmatpush.msra.mxu0 %v39
    %149 = vmatpush.msra.mxu0 %v38
    %150 = vmatpush.msra.mxu0 %v37
    %151 = vmatpush.msra.mxu0 %v36
    %152 = vmatpush.msra.mxu0 %v35
    %153 = vmatpush.msra.mxu0 %v34
    %154 = vmatpush.msra.mxu0 %v33
    %155 = vmatpush.msra.mxu0 %v32
    %156 = vmatpush.msra.mxu0 %v31
    %157 = vmatpush.msra.mxu0 %v30
    %158 = vmatpush.msra.mxu0 %v29
    %159 = vmatpush.msra.mxu0 %v28
    %160 = vmatmul.f32.gmra.mxu0 %v21
    %v161 = vpop.f32.mrf.mxu0
    %v162 = vadd.f32 %v142, %v161
    %163 = vdwg.mxu0
    %164 = vmatpush.msra.mxu0 %v59
    %165 = vmatpush.msra.mxu0 %v58
    %166 = vmatpush.msra.mxu0 %v57
    %167 = vmatpush.msra.mxu0 %v56
    %168 = vmatpush.msra.mxu0 %v55
    %169 = vmatpush.msra.mxu0 %v54
    %170 = vmatpush.msra.mxu0 %v53
    %171 = vmatpush.msra.mxu0 %v52
    %172 = vmatpush.msra.mxu0 %v51
    %173 = vmatpush.msra.mxu0 %v50
    %174 = vmatpush.msra.mxu0 %v49
    %175 = vmatpush.msra.mxu0 %v48
    %176 = vmatpush.msra.mxu0 %v47
    %177 = vmatpush.msra.mxu0 %v46
    %178 = vmatpush.msra.mxu0 %v45
    %179 = vmatpush.msra.mxu0 %v44
    %180 = vmatmul.f32.gmra.mxu0 %v22
    %v181 = vpop.f32.mrf.mxu0
    %v182 = vadd.f32 %v162, %v181
    %183 = vdwg.mxu0
    %184 = vmatpush.msra.mxu0 %v75
    %185 = vmatpush.msra.mxu0 %v74
    %186 = vmatpush.msra.mxu0 %v73
    %187 = vmatpush.msra.mxu0 %v72
    %188 = vmatpush.msra.mxu0 %v71
    %189 = vmatpush.msra.mxu0 %v70
    %190 = vmatpush.msra.mxu0 %v69
    %191 = vmatpush.msra.mxu0 %v68
    %192 = vmatpush.msra.mxu0 %v67
    %193 = vmatpush.msra.mxu0 %v66
    %194 = vmatpush.msra.mxu0 %v65
    %195 = vmatpush.msra.mxu0 %v64
    %196 = vmatpush.msra.mxu0 %v63
    %197 = vmatpush.msra.mxu0 %v62
    %198 = vmatpush.msra.mxu0 %v61
    %199 = vmatpush.msra.mxu0 %v60
    %200 = vmatmul.f32.gmra.mxu0 %v23
    %v201 = vpop.f32.mrf.mxu0
    %v202 = vadd.f32 %v182, %v201
    %203 = vdwg.mxu0
    %204 = vmatpush.msra.mxu0 %v91
    %205 = vmatpush.msra.mxu0 %v90
    %206 = vmatpush.msra.mxu0 %v89
    %207 = vmatpush.msra.mxu0 %v88
    %208 = vmatpush.msra.mxu0 %v87
    %209 = vmatpush.msra.mxu0 %v86
    %210 = vmatpush.msra.mxu0 %v85
    %211 = vmatpush.msra.mxu0 %v84
    %212 = vmatpush.msra.mxu0 %v83
    %213 = vmatpush.msra.mxu0 %v82
    %214 = vmatpush.msra.mxu0 %v81
    %215 = vmatpush.msra.mxu0 %v80
    %216 = vmatpush.msra.mxu0 %v79
    %217 = vmatpush.msra.mxu0 %v78
    %218 = vmatpush.msra.mxu0 %v77
    %219 = vmatpush.msra.mxu0 %v76
    %220 = vmatmul.f32.gmra.mxu0 %v24
    %v221 = vpop.f32.mrf.mxu0
    %v222 = vadd.f32 %v202, %v221
    %223 = vdwg.mxu0
    %224 = vmatpush.msra.mxu0 %v107
    %225 = vmatpush.msra.mxu0 %v106
    %226 = vmatpush.msra.mxu0 %v105
    %227 = vmatpush.msra.mxu0 %v104
    %228 = vmatpush.msra.mxu0 %v103
    %229 = vmatpush.msra.mxu0 %v102
    %230 = vmatpush.msra.mxu0 %v101
    %231 = vmatpush.msra.mxu0 %v100
    %232 = vmatpush.msra.mxu0 %v99
    %233 = vmatpush.msra.mxu0 %v98
    %234 = vmatpush.msra.mxu0 %v97
    %235 = vmatpush.msra.mxu0 %v96
    %236 = vmatpush.msra.mxu0 %v95
    %237 = vmatpush.msra.mxu0 %v94
    %238 = vmatpush.msra.mxu0 %v93
    %239 = vmatpush.msra.mxu0 %v92
    %240 = vmatmul.f32.gmra.mxu0 %v25
    %v241 = vpop.f32.mrf.mxu0
    %v242 = vadd.f32 %v222, %v241
    %243 = vdwg.mxu0
    %244 = vmatpush.msra.mxu0 %v123
    %245 = vmatpush.msra.mxu0 %v122
    %246 = vmatpush.msra.mxu0 %v121
    %247 = vmatpush.msra.mxu0 %v120
    %248 = vmatpush.msra.mxu0 %v119
    %249 = vmatpush.msra.mxu0 %v118
    %250 = vmatpush.msra.mxu0 %v117
    %251 = vmatpush.msra.mxu0 %v116
    %252 = vmatpush.msra.mxu0 %v115
    %253 = vmatpush.msra.mxu0 %v114
    %254 = vmatpush.msra.mxu0 %v113
    %255 = vmatpush.msra.mxu0 %v112
    %256 = vmatpush.msra.mxu0 %v111
    %257 = vmatpush.msra.mxu0 %v110
    %258 = vmatpush.msra.mxu0 %v109
    %259 = vmatpush.msra.mxu0 %v108
    %260 = vmatmul.f32.gmra.mxu0 %v26
    %v261 = vpop.f32.mrf.mxu0
    %v262 = vadd.f32 %v242, %v261
    %263 = vdwg.mxu0
    %264 = vmatpush.msra.mxu0 %v139
    %265 = vmatpush.msra.mxu0 %v138
    %266 = vmatpush.msra.mxu0 %v137
    %267 = vmatpush.msra.mxu0 %v136
    %268 = vmatpush.msra.mxu0 %v135
    %269 = vmatpush.msra.mxu0 %v134
    %270 = vmatpush.msra.mxu0 %v133
    %271 = vmatpush.msra.mxu0 %v132
    %272 = vmatpush.msra.mxu0 %v131
    %273 = vmatpush.msra.mxu0 %v130
    %274 = vmatpush.msra.mxu0 %v129
    %275 = vmatpush.msra.mxu0 %v128
    %276 = vmatpush.msra.mxu0 %v127
    %277 = vmatpush.msra.mxu0 %v126
    %278 = vmatpush.msra.mxu0 %v125
    %279 = vmatpush.msra.mxu0 %v124
    %280 = vmatmul.f32.gmra.mxu0 %v27
    %v281 = vpop.f32.mrf.mxu0
    %v282 = vadd.f32 %v262, %v281
    %283 = vdwg.mxu0
    %v284 = vmax.f32 %v282, 0.0
    %v285 = vld [vmem:[%s3] sm:$0xff]
    %v286 = vld [vmem:[%s3 + $0x8] sm:$0xff]
    %v287 = vld [vmem:[%s3 + $0x10] sm:$0xff]
    %v288 = vld [vmem:[%s3 + $0x18] sm:$0xff]
    %v289 = vld [vmem:[%s3 + $0x20] sm:$0xff]
    %v290 = vld [vmem:[%s3 + $0x28] sm:$0xff]
    %v291 = vld [vmem:[%s3 + $0x30] sm:$0xff]
    %v292 = vld [vmem:[%s3 + $0x38] sm:$0xff]
    %v293 = vld [vmem:[%s3 + $0x40] sm:$0xff]
    %v294 = vld [vmem:[%s3 + $0x48] sm:$0xff]
    %v295 = vld [vmem:[%s3 + $0x50] sm:$0xff]
    %v296 = vld [vmem:[%s3 + $0x58] sm:$0xff]
    %v297 = vld [vmem:[%s3 + $0x60] sm:$0xff]
    %v298 = vld [vmem:[%s3 + $0x68] sm:$0xff]
    %v299 = vld [vmem:[%s3 + $0x70] sm:$0xff]
    %v300 = vld [vmem:[%s3 + $0x78] sm:$0xff]
    %v301 = vld [vmem:[%s3 + $0x80] sm:$0xff]
    %v302 = vld [vmem:[%s3 + $0x88] sm:$0xff]
    %v303 = vld [vmem:[%s3 + $0x90] sm:$0xff]
    %v304 = vld [vmem:[%s3 + $0x98] sm:$0xff]
    %v305 = vld [vmem:[%s3 + $0xa0] sm:$0xff]
    %v306 = vld [vmem:[%s3 + $0xa8] sm:$0xff]
    %v307 = vld [vmem:[%s3 + $0xb0] sm:$0xff]
    %v308 = vld [vmem:[%s3 + $0xb8] sm:$0xff]
    %v309 = vld [vmem:[%s3 + $0xc0] sm:$0xff]
    %v310 = vld [vmem:[%s3 + $0xc8] sm:$0xff]
    %v311 = vld [vmem:[%s3 + $0xd0] sm:$0xff]
    %v312 = vld [vmem:[%s3 + $0xd8] sm:$0xff]
    %v313 = vld [vmem:[%s4] sm:$0xff]
    %v315 = vperm.slane %v313, 0
    %v316 = vperm.slane %v313, 1
    %v317 = vperm.slane %v313, 2
    %v318 = vperm.slane %v313, 3
    %v319 = vperm.slane %v313, 4
    %v320 = vperm.slane %v313, 5
    %v321 = vperm.slane %v313, 6
    %vm329 = vcmask 261120
    %v331 = vsel %vm329, %v284, 0
    %333 = vmatpush.msra.mxu0 0.0
    %334 = vmatpush.msra.mxu0 0.0
    %335 = vmatpush.msra.mxu0 0.0
    %336 = vmatpush.msra.mxu0 0.0
    %337 = vmatpush.msra.mxu0 0.0
    %338 = vmatpush.msra.mxu0 0.0
    %339 = vmatpush.msra.mxu0 0.0
    %340 = vmatpush.msra.mxu0 0.0
    %341 = vmatpush.msra.mxu0 0.0
    %342 = vmatpush.msra.mxu0 0.0
    %343 = vmatpush.msra.mxu0 0.0
    %344 = vmatpush.msra.mxu0 0.0
    %345 = vmatpush.msra.mxu0 %v306
    %346 = vmatpush.msra.mxu0 %v299
    %347 = vmatpush.msra.mxu0 %v292
    %348 = vmatpush.msra.mxu0 %v285
    %349 = vmatmul.f32.gmra.mxu0 %v331
    %v350 = vpop.f32.mrf.mxu0
    %v351 = vadd.f32 %v315, %v350
    %352 = vdwg.mxu0
    %353 = vmatpush.msra.mxu0 0.0
    %354 = vmatpush.msra.mxu0 0.0
    %355 = vmatpush.msra.mxu0 0.0
    %356 = vmatpush.msra.mxu0 0.0
    %357 = vmatpush.msra.mxu0 0.0
    %358 = vmatpush.msra.mxu0 0.0
    %359 = vmatpush.msra.mxu0 0.0
    %360 = vmatpush.msra.mxu0 0.0
    %361 = vmatpush.msra.mxu0 0.0
    %362 = vmatpush.msra.mxu0 0.0
    %363 = vmatpush.msra.mxu0 0.0
    %364 = vmatpush.msra.mxu0 0.0
    %365 = vmatpush.msra.mxu0 %v307
    %366 = vmatpush.msra.mxu0 %v300
    %367 = vmatpush.msra.mxu0 %v293
    %368 = vmatpush.msra.mxu0 %v286
    %369 = vmatmul.f32.gmra.mxu0 %v331
    %v370 = vpop.f32.mrf.mxu0
    %v371 = vadd.f32 %v316, %v370
    %372 = vdwg.mxu0
    %373 = vmatpush.msra.mxu0 0.0
    %374 = vmatpush.msra.mxu0 0.0
    %375 = vmatpush.msra.mxu0 0.0
    %376 = vmatpush.msra.mxu0 0.0
    %377 = vmatpush.msra.mxu0 0.0
    %378 = vmatpush.msra.mxu0 0.0
    %379 = vmatpush.msra.mxu0 0.0
    %380 = vmatpush.msra.mxu0 0.0
    %381 = vmatpush.msra.mxu0 0.0
    %382 = vmatpush.msra.mxu0 0.0
    %383 = vmatpush.msra.mxu0 0.0
    %384 = vmatpush.msra.mxu0 0.0
    %385 = vmatpush.msra.mxu0 %v308
    %386 = vmatpush.msra.mxu0 %v301
    %387 = vmatpush.msra.mxu0 %v294
    %388 = vmatpush.msra.mxu0 %v287
    %389 = vmatmul.f32.gmra.mxu0 %v331
    %v390 = vpop.f32.mrf.mxu0
    %v391 = vadd.f32 %v317, %v390
    %392 = vdwg.mxu0
    %393 = vmatpush.msra.mxu0 0.0
    %394 = vmatpush.msra.mxu0 0.0
    %395 = vmatpush.msra.mxu0 0.0
    %396 = vmatpush.msra.mxu0 0.0
    %397 = vmatpush.msra.mxu0 0.0
    %398 = vmatpush.msra.mxu0 0.0
    %399 = vmatpush.msra.mxu0 0.0
    %400 = vmatpush.msra.mxu0 0.0
    %401 = vmatpush.msra.mxu0 0.0
    %402 = vmatpush.msra.mxu0 0.0
    %403 = vmatpush.msra.mxu0 0.0
    %404 = vmatpush.msra.mxu0 0.0
    %405 = vmatpush.msra.mxu0 %v309
    %406 = vmatpush.msra.mxu0 %v302
    %407 = vmatpush.msra.mxu0 %v295
    %408 = vmatpush.msra.mxu0 %v288
    %409 = vmatmul.f32.gmra.mxu0 %v331
    %v410 = vpop.f32.mrf.mxu0
    %v411 = vadd.f32 %v318, %v410
    %412 = vdwg.mxu0
    %413 = vmatpush.msra.mxu0 0.0
    %414 = vmatpush.msra.mxu0 0.0
    %415 = vmatpush.msra.mxu0 0.0
    %416 = vmatpush.msra.mxu0 0.0
    %417 = vmatpush.msra.mxu0 0.0
    %418 = vmatpush.msra.mxu0 0.0
    %419 = vmatpush.msra.mxu0 0.0
    %420 = vmatpush.msra.mxu0 0.0
    %421 = vmatpush.msra.mxu0 0.0
    %422 = vmatpush.msra.mxu0 0.0
    %423 = vmatpush.msra.mxu0 0.0
    %424 = vmatpush.msra.mxu0 0.0
    %425 = vmatpush.msra.mxu0 %v310
    %426 = vmatpush.msra.mxu0 %v303
    %427 = vmatpush.msra.mxu0 %v296
    %428 = vmatpush.msra.mxu0 %v289
    %429 = vmatmul.f32.gmra.mxu0 %v331
    %v430 = vpop.f32.mrf.mxu0
    %v431 = vadd.f32 %v319, %v430
    %432 = vdwg.mxu0
    %433 = vmatpush.msra.mxu0 0.0
    %434 = vmatpush.msra.mxu0 0.0
    %435 = vmatpush.msra.mxu0 0.0
    %436 = vmatpush.msra.mxu0 0.0
    %437 = vmatpush.msra.mxu0 0.0
    %438 = vmatpush.msra.mxu0 0.0
    %439 = vmatpush.msra.mxu0 0.0
    %440 = vmatpush.msra.mxu0 0.0
    %441 = vmatpush.msra.mxu0 0.0
    %442 = vmatpush.msra.mxu0 0.0
    %443 = vmatpush.msra.mxu0 0.0
    %444 = vmatpush.msra.mxu0 0.0
    %445 = vmatpush.msra.mxu0 %v311
    %446 = vmatpush.msra.mxu0 %v304
    %447 = vmatpush.msra.mxu0 %v297
    %448 = vmatpush.msra.mxu0 %v290
    %449 = vmatmul.f32.gmra.mxu0 %v331
    %v450 = vpop.f32.mrf.mxu0
    %v451 = vadd.f32 %v320, %v450
    %452 = vdwg.mxu0
    %453 = vmatpush.msra.mxu0 0.0
    %454 = vmatpush.msra.mxu0 0.0
    %455 = vmatpush.msra.mxu0 0.0
    %456 = vmatpush.msra.mxu0 0.0
    %457 = vmatpush.msra.mxu0 0.0
    %458 = vmatpush.msra.mxu0 0.0
    %459 = vmatpush.msra.mxu0 0.0
    %460 = vmatpush.msra.mxu0 0.0
    %461 = vmatpush.msra.mxu0 0.0
    %462 = vmatpush.msra.mxu0 0.0
    %463 = vmatpush.msra.mxu0 0.0
    %464 = vmatpush.msra.mxu0 0.0
    %465 = vmatpush.msra.mxu0 %v312
    %466 = vmatpush.msra.mxu0 %v305
    %467 = vmatpush.msra.mxu0 %v298
    %468 = vmatpush.msra.mxu0 %v291
    %469 = vmatmul.f32.gmra.mxu0 %v331
    %v470 = vpop.f32.mrf.mxu0
    %v471 = vadd.f32 %v321, %v470
    %472 = vdwg.mxu0
    %v473 = vxor.u32 %v351, 2147483648
    %v474 = vxor.u32 %v371, 2147483648
    %v475 = vxor.u32 %v391, 2147483648
    %v476 = vxor.u32 %v411, 2147483648
    %v477 = vxor.u32 %v431, 2147483648
    %v478 = vxor.u32 %v451, 2147483648
    %v479 = vxor.u32 %v471, 2147483648
    %v480 = vmul.f32 %v473, 1.442695
    %v481 = vpow.pop %v480
    %v482 = vmul.f32 %v474, 1.442695
    %v483 = vpow.pop %v482
    %v484 = vmul.f32 %v475, 1.442695
    %v485 = vpow.pop %v484
    %v486 = vmul.f32 %v476, 1.442695
    %v487 = vpow.pop %v486
    %v488 = vmul.f32 %v477, 1.442695
    %v489 = vpow.pop %v488
    %v490 = vmul.f32 %v478, 1.442695
    %v491 = vpow.pop %v490
    %v492 = vmul.f32 %v479, 1.442695
    %v493 = vpow.pop %v492
    %v494 = vadd.f32 %v481, 1.0
    %v495 = vadd.f32 %v483, 1.0
    %v496 = vadd.f32 %v485, 1.0
    %v497 = vadd.f32 %v487, 1.0
    %v498 = vadd.f32 %v489, 1.0
    %v499 = vadd.f32 %v491, 1.0
    %v500 = vadd.f32 %v493, 1.0
    %v501 = vrcp.pop %v494
    %v502 = vmul.f32 %v494, %v501
    %v503 = vsub.f32 1.0, %v502
    %v504 = vmul.f32 %v501, %v503
    %v505 = vadd.f32 %v501, %v504
    %vm506 = vweird.f32 %v494
    %vm507 = vweird.f32 %v501
    %vm508 = vmor %vm506, %vm507
    %v509 = vsel %vm508, %v501, %v505
    %v510 = vand.u32 2147483647, %v494
    %vm511 = vcmp.eq.f32.partialorder %v510, 8.507059e+37
    %v512 = vand.u32 %v494, 2147483648
    %v513 = vor.u32 1.1754944e-38, %v512
    %v514 = vsel %vm511, %v513, %v509
    %v515 = vmul.f32 1.0, %v514
    %v516 = vrcp.pop %v495
    %v517 = vmul.f32 %v495, %v516
    %v518 = vsub.f32 1.0, %v517
    %v519 = vmul.f32 %v516, %v518
    %v520 = vadd.f32 %v516, %v519
    %vm521 = vweird.f32 %v495
    %vm522 = vweird.f32 %v516
    %vm523 = vmor %vm521, %vm522
    %v524 = vsel %vm523, %v516, %v520
    %v525 = vand.u32 2147483647, %v495
    %vm526 = vcmp.eq.f32.partialorder %v525, 8.507059e+37
    %v527 = vand.u32 %v495, 2147483648
    %v528 = vor.u32 1.1754944e-38, %v527
    %v529 = vsel %vm526, %v528, %v524
    %v530 = vmul.f32 1.0, %v529
    %v531 = vrcp.pop %v496
    %v532 = vmul.f32 %v496, %v531
    %v533 = vsub.f32 1.0, %v532
    %v534 = vmul.f32 %v531, %v533
    %v535 = vadd.f32 %v531, %v534
    %vm536 = vweird.f32 %v496
    %vm537 = vweird.f32 %v531
    %vm538 = vmor %vm536, %vm537
    %v539 = vsel %vm538, %v531, %v535
    %v540 = vand.u32 2147483647, %v496
    %vm541 = vcmp.eq.f32.partialorder %v540, 8.507059e+37
    %v542 = vand.u32 %v496, 2147483648
    %v543 = vor.u32 1.1754944e-38, %v542
    %v544 = vsel %vm541, %v543, %v539
    %v545 = vmul.f32 1.0, %v544
    %v546 = vrcp.pop %v497
    %v547 = vmul.f32 %v497, %v546
    %v548 = vsub.f32 1.0, %v547
    %v549 = vmul.f32 %v546, %v548
    %v550 = vadd.f32 %v546, %v549
    %vm551 = vweird.f32 %v497
    %vm552 = vweird.f32 %v546
    %vm553 = vmor %vm551, %vm552
    %v554 = vsel %vm553, %v546, %v550
    %v555 = vand.u32 2147483647, %v497
    %vm556 = vcmp.eq.f32.partialorder %v555, 8.507059e+37
    %v557 = vand.u32 %v497, 2147483648
    %v558 = vor.u32 1.1754944e-38, %v557
    %v559 = vsel %vm556, %v558, %v554
    %v560 = vmul.f32 1.0, %v559
    %v561 = vrcp.pop %v498
    %v562 = vmul.f32 %v498, %v561
    %v563 = vsub.f32 1.0, %v562
    %v564 = vmul.f32 %v561, %v563
    %v565 = vadd.f32 %v561, %v564
    %vm566 = vweird.f32 %v498
    %vm567 = vweird.f32 %v561
    %vm568 = vmor %vm566, %vm567
    %v569 = vsel %vm568, %v561, %v565
    %v570 = vand.u32 2147483647, %v498
    %vm571 = vcmp.eq.f32.partialorder %v570, 8.507059e+37
    %v572 = vand.u32 %v498, 2147483648
    %v573 = vor.u32 1.1754944e-38, %v572
    %v574 = vsel %vm571, %v573, %v569
    %v575 = vmul.f32 1.0, %v574
    %v576 = vrcp.pop %v499
    %v577 = vmul.f32 %v499, %v576
    %v578 = vsub.f32 1.0, %v577
    %v579 = vmul.f32 %v576, %v578
    %v580 = vadd.f32 %v576, %v579
    %vm581 = vweird.f32 %v499
    %vm582 = vweird.f32 %v576
    %vm583 = vmor %vm581, %vm582
    %v584 = vsel %vm583, %v576, %v580
    %v585 = vand.u32 2147483647, %v499
    %vm586 = vcmp.eq.f32.partialorder %v585, 8.507059e+37
    %v587 = vand.u32 %v499, 2147483648
    %v588 = vor.u32 1.1754944e-38, %v587
    %v589 = vsel %vm586, %v588, %v584
    %v590 = vmul.f32 1.0, %v589
    %v591 = vrcp.pop %v500
    %v592 = vmul.f32 %v500, %v591
    %v593 = vsub.f32 1.0, %v592
    %v594 = vmul.f32 %v591, %v593
    %v595 = vadd.f32 %v591, %v594
    %vm596 = vweird.f32 %v500
    %vm597 = vweird.f32 %v591
    %vm598 = vmor %vm596, %vm597
    %v599 = vsel %vm598, %v591, %v595
    %v600 = vand.u32 2147483647, %v500
    %vm601 = vcmp.eq.f32.partialorder %v600, 8.507059e+37
    %v602 = vand.u32 %v500, 2147483648
    %v603 = vor.u32 1.1754944e-38, %v602
    %v604 = vsel %vm601, %v603, %v599
    %v605 = vmul.f32 1.0, %v604
    %606 = vst [vmem:[#allocation2] sm:$0xff] %v515
    %607 = vst [vmem:[#allocation2 + $0x8] sm:$0xff] %v530
    %608 = vst [vmem:[#allocation2 + $0x10] sm:$0xff] %v545
    %609 = vst [vmem:[#allocation2 + $0x18] sm:$0xff] %v560
    %610 = vst [vmem:[#allocation2 + $0x20] sm:$0xff] %v575
    %611 = vst [vmem:[#allocation2 + $0x28] sm:$0xff] %v590
    %612 = vst [vmem:[#allocation2 + $0x30] sm:$0xff] %v605
    // Predicated region
    $region22: #{tpu_custom_call.1} parent=1 // pred_check
      _
    $region23: #{tpu_custom_call.1} parent=1 // pred_check_branch
      %614 = sbr.rel (0) target = $region25
    $region24: #{tpu_custom_call.1} parent=1 // pred_region
      %616 = vsyncadd [#allocation3], 0
      %s618 = sshll.u32 [#allocation2], 4
      %s619 = int_to_ptr.vmem [resolvable:$true] %s618
      %s620 = sshll.u32 %s5, 4
      %s621 = int_to_ptr.hbm [resolvable:$true] %s620
      %623 = dma.vmem_to_hbm [thread:$0]  %s619, 896, %s621, [#allocation3]
    $region25: #{tpu_custom_call.1} parent=1 // pred_fallthru
      _
    // Predicated region
    $region26: #{tpu_custom_call.1} parent=1 // pred_check
      _
    $region27: #{tpu_custom_call.1} parent=1 // pred_check_branch
      %625 = sbr.rel (0) target = $region29
    $region28: #{tpu_custom_call.1} parent=1 // pred_region
      %627 = dma.done [#allocation3], 896
    $region29: #{tpu_custom_call.1} parent=1 // pred_fallthru
      _
    %628 = vsyncpa [#allocation3], 1

</llo_original>
